<compile_context>
chip_gen: v6e
topology: v6e:2x2x1
jax: 0.10.0
libtpu: 0.0.40
codegen_flags: <defaults>
</compile_context>

<pallas_src>
import functools

import jax
import jax.numpy as jnp
from jax.experimental import pallas as pl
from jax.experimental.pallas import tpu as pltpu

INPUT_DIM = 1
HIDDEN_DIM = 16
OUTPUT_DIM = 1
LANES = 128


def _round_up(n, m):
    return ((n + m - 1) // m) * m


def mlnet_kernel(x_ref, w1_ref, b1_ref, w2_ref, b2_ref, o_ref, *, compute_dtype):
    # x_ref/o_ref: (tile_rows, 128) f32 in VMEM.
    # w1_ref/b1_ref/w2_ref: (16,) f32 in SMEM; b2_ref: (1,) f32 in SMEM.
    x = x_ref[...].astype(compute_dtype)
    # Fold b2 into the accumulator init (saves the zeros init + final full-tile add).
    acc = jnp.full(x.shape, b2_ref[0].astype(compute_dtype), dtype=compute_dtype)
    # Fully-unrolled 16-step VPU loop: acc += relu(x*w1_j + b1_j) * w2_j
    for j in range(HIDDEN_DIM):
        w1j = w1_ref[j].astype(compute_dtype)
        b1j = b1_ref[j].astype(compute_dtype)
        w2j = w2_ref[j].astype(compute_dtype)
        h = jnp.maximum(x * w1j + b1j, 0.0)
        acc = acc + h * w2j
    o_ref[...] = acc.astype(o_ref.dtype)


def _pick_tile_rows(rows, tile_rows):
    """8-sublane-aligned batch tile; guarantee >=2 grid steps when rows > 8 so the
    'parallel' axis actually spans both v7x TensorCores."""
    if rows <= 8:
        return rows  # single tiny tile; block dim == full array dim is allowed
    half = _round_up(pl.cdiv(rows, 2), 8)
    return max(8, min(_round_up(tile_rows, 8), half))


def _mlnet_bulk(x2d, w1, b1, w2, b2, tile_rows, compute_dtype):
    rows, lanes = x2d.shape
    tr = _pick_tile_rows(rows, tile_rows)
    n_tiles = pl.cdiv(rows, tr)  # boundary block (if any) is masked; math is pointwise
    kernel = functools.partial(mlnet_kernel, compute_dtype=compute_dtype)
    return pl.pallas_call(
        kernel,
        out_shape=jax.ShapeDtypeStruct((rows, lanes), x2d.dtype),
        grid=(n_tiles,),
        in_specs=[
            pl.BlockSpec((tr, lanes), lambda i: (i, 0)),            # batch tile (VMEM, pipelined)
            pl.BlockSpec(memory_space=pltpu.MemorySpace.SMEM),      # w1 (16,)
            pl.BlockSpec(memory_space=pltpu.MemorySpace.SMEM),      # b1 (16,)
            pl.BlockSpec(memory_space=pltpu.MemorySpace.SMEM),      # w2 (16,)
            pl.BlockSpec(memory_space=pltpu.MemorySpace.SMEM),      # b2 (1,)
        ],
        out_specs=pl.BlockSpec((tr, lanes), lambda i: (i, 0)),
        compiler_params=pltpu.CompilerParams(
            dimension_semantics=("parallel",),  # lets v7x shard the batch grid over its 2 TCs
        ),
    )(x2d, w1, b1, w2, b2)


def mlnet_forward(x, w1, b1, w2, b2, *, tile_rows=2048, compute_dtype=jnp.float32):
    """x: (B, 1) f32; w1/b1/w2: (16,) f32; b2: (1,) f32 -> (B, 1) f32."""
    B, in_dim = x.shape
    assert in_dim == INPUT_DIM

    bulk = (B // LANES) * LANES
    pieces = []

    if bulk > 0:
        xb = x if bulk == B else x[:bulk]
        x2d = xb.reshape(bulk // LANES, LANES)  # row-major reshape: zero-copy bitcast
        y2d = _mlnet_bulk(x2d, w1, b1, w2, b2, tile_rows, compute_dtype)
        pieces.append(y2d.reshape(bulk, OUTPUT_DIM))

    if bulk < B:
        # <128-element tail: plain JAX; too small to be worth a masked kernel tile.
        xt = x[bulk:]
        ht = jnp.maximum(xt * w1.reshape(1, HIDDEN_DIM) + b1.reshape(1, HIDDEN_DIM), 0.0)
        yt = ht @ w2.reshape(HIDDEN_DIM, OUTPUT_DIM) + b2.reshape(1, OUTPUT_DIM)
        pieces.append(yt.astype(x.dtype))

    return pieces[0] if len(pieces) == 1 else jnp.concatenate(pieces, axis=0)


def init_params(key):
    # Mimic torch.nn.Linear default init: U(-1/sqrt(fan_in), 1/sqrt(fan_in)).
    k1, k2, k3, k4 = jax.random.split(key, 4)
    bound1 = 1.0 / (INPUT_DIM ** 0.5)
    bound2 = 1.0 / (HIDDEN_DIM ** 0.5)
    w1 = jax.random.uniform(k1, (HIDDEN_DIM,), jnp.float32, -bound1, bound1)   # fc1 weight (in=1 -> flat)
    b1 = jax.random.uniform(k2, (HIDDEN_DIM,), jnp.float32, -bound1, bound1)   # fc1 bias
    w2 = jax.random.uniform(k3, (HIDDEN_DIM,), jnp.float32, -bound2, bound2)   # fc2 weight (out=1 -> flat)
    b2 = jax.random.uniform(k4, (OUTPUT_DIM,), jnp.float32, -bound2, bound2)   # fc2 bias
    return w1, b1, w2, b2


def mlnet_reference(x, w1, b1, w2, b2):
    h = jnp.maximum(x @ w1.reshape(INPUT_DIM, HIDDEN_DIM) + b1.reshape(1, HIDDEN_DIM), 0.0)
    return h @ w2.reshape(HIDDEN_DIM, OUTPUT_DIM) + b2.reshape(1, OUTPUT_DIM)


if __name__ == "__main__":
    key = jax.random.PRNGKey(0)
    kx, kp = jax.random.split(key)
    w1, b1, w2, b2 = init_params(kp)

    # Small batch sizes that exercise: single-tile bulk + JAX tail (300), exact
    # multiple of 128 / zero-copy path (1024), and a multi-tile grid with a partial
    # (masked) boundary block (2500).
    for B in (300, 1024, 2500):
        x = jax.random.normal(jax.random.fold_in(kx, B), (B, INPUT_DIM), jnp.float32)
        out = jax.block_until_ready(mlnet_forward(x, w1, b1, w2, b2))
        ref = mlnet_reference(x, w1, b1, w2, b2)
        assert out.shape == (B, OUTPUT_DIM)
        assert jnp.allclose(out, ref, atol=1e-5, rtol=1e-5), f"f32 mismatch at B={B}"

    # bf16 VALU-packing path (the v6e/v7x lever from the review); accumulation is
    # bf16, so compare against the f32 reference with a loose tolerance.
    xb = jax.random.normal(jax.random.fold_in(kx, 7), (2500, INPUT_DIM), jnp.float32)
    out_bf16 = jax.block_until_ready(
        mlnet_forward(xb, w1, b1, w2, b2, compute_dtype=jnp.bfloat16))
    ref_b = mlnet_reference(xb, w1, b1, w2, b2)
    assert out_bf16.shape == (2500, OUTPUT_DIM)
    assert jnp.allclose(out_bf16, ref_b, atol=0.35, rtol=0.1), "bf16 smoke-test mismatch"

    print("KERNEL_OK")
</pallas_src>

<mosaic_0001>
module attributes {stable_mosaic.version = 11 : i64} {
  func.func @mlnet_kernel(%arg0: i32, %arg1: memref<2x128xf32, #tpu.memory_space<vmem>>, %arg2: memref<16xf32, #tpu.memory_space<smem>>, %arg3: memref<16xf32, #tpu.memory_space<smem>>, %arg4: memref<16xf32, #tpu.memory_space<smem>>, %arg5: memref<1xf32, #tpu.memory_space<smem>>, %arg6: memref<2x128xf32, #tpu.memory_space<vmem>>) attributes {dimension_semantics = [#tpu.dimension_semantics<parallel>], iteration_bounds = array<i64: 1>, scalar_prefetch = 0 : i64, scratch_operands = 0 : i64, tpu.core_type = #tpu.core_type<tc>, window_params = [{transform_indices = @transform_0, window_bounds = array<i64: 2, 128>}, {transform_indices = @transform_1, window_bounds = array<i64: 16>}, {transform_indices = @transform_2, window_bounds = array<i64: 16>}, {transform_indices = @transform_3, window_bounds = array<i64: 16>}, {transform_indices = @transform_4, window_bounds = array<i64: 1>}, {transform_indices = @transform_5, window_bounds = array<i64: 2, 128>}]} {
    %c0 = arith.constant 0 : index
    %c0_0 = arith.constant 0 : index
    %0 = vector.load %arg1[%c0, %c0_0] : memref<2x128xf32, #tpu.memory_space<vmem>>, vector<2x128xf32>
    %c0_1 = arith.constant 0 : index
    %1 = memref.load %arg5[%c0_1] : memref<1xf32, #tpu.memory_space<smem>>
    %2 = vector.broadcast %1 : f32 to vector<2x128xf32>
    %c0_2 = arith.constant 0 : index
    %3 = memref.load %arg2[%c0_2] : memref<16xf32, #tpu.memory_space<smem>>
    %c0_3 = arith.constant 0 : index
    %4 = memref.load %arg3[%c0_3] : memref<16xf32, #tpu.memory_space<smem>>
    %c0_4 = arith.constant 0 : index
    %5 = memref.load %arg4[%c0_4] : memref<16xf32, #tpu.memory_space<smem>>
    %6 = vector.broadcast %3 : f32 to vector<2x128xf32>
    %7 = arith.mulf %0, %6 : vector<2x128xf32>
    %8 = vector.broadcast %4 : f32 to vector<2x128xf32>
    %9 = arith.addf %7, %8 : vector<2x128xf32>
    %cst = arith.constant 0.000000e+00 : f32
    %10 = vector.broadcast %cst : f32 to vector<2x128xf32>
    %11 = arith.maximumf %9, %10 : vector<2x128xf32>
    %12 = vector.broadcast %5 : f32 to vector<2x128xf32>
    %13 = arith.mulf %11, %12 : vector<2x128xf32>
    %14 = arith.addf %2, %13 : vector<2x128xf32>
    %c1 = arith.constant 1 : index
    %15 = memref.load %arg2[%c1] : memref<16xf32, #tpu.memory_space<smem>>
    %c1_5 = arith.constant 1 : index
    %16 = memref.load %arg3[%c1_5] : memref<16xf32, #tpu.memory_space<smem>>
    %c1_6 = arith.constant 1 : index
    %17 = memref.load %arg4[%c1_6] : memref<16xf32, #tpu.memory_space<smem>>
    %18 = vector.broadcast %15 : f32 to vector<2x128xf32>
    %19 = arith.mulf %0, %18 : vector<2x128xf32>
    %20 = vector.broadcast %16 : f32 to vector<2x128xf32>
    %21 = arith.addf %19, %20 : vector<2x128xf32>
    %cst_7 = arith.constant 0.000000e+00 : f32
    %22 = vector.broadcast %cst_7 : f32 to vector<2x128xf32>
    %23 = arith.maximumf %21, %22 : vector<2x128xf32>
    %24 = vector.broadcast %17 : f32 to vector<2x128xf32>
    %25 = arith.mulf %23, %24 : vector<2x128xf32>
    %26 = arith.addf %14, %25 : vector<2x128xf32>
    %c2 = arith.constant 2 : index
    %27 = memref.load %arg2[%c2] : memref<16xf32, #tpu.memory_space<smem>>
    %c2_8 = arith.constant 2 : index
    %28 = memref.load %arg3[%c2_8] : memref<16xf32, #tpu.memory_space<smem>>
    %c2_9 = arith.constant 2 : index
    %29 = memref.load %arg4[%c2_9] : memref<16xf32, #tpu.memory_space<smem>>
    %30 = vector.broadcast %27 : f32 to vector<2x128xf32>
    %31 = arith.mulf %0, %30 : vector<2x128xf32>
    %32 = vector.broadcast %28 : f32 to vector<2x128xf32>
    %33 = arith.addf %31, %32 : vector<2x128xf32>
    %cst_10 = arith.constant 0.000000e+00 : f32
    %34 = vector.broadcast %cst_10 : f32 to vector<2x128xf32>
    %35 = arith.maximumf %33, %34 : vector<2x128xf32>
    %36 = vector.broadcast %29 : f32 to vector<2x128xf32>
    %37 = arith.mulf %35, %36 : vector<2x128xf32>
    %38 = arith.addf %26, %37 : vector<2x128xf32>
    %c3 = arith.constant 3 : index
    %39 = memref.load %arg2[%c3] : memref<16xf32, #tpu.memory_space<smem>>
    %c3_11 = arith.constant 3 : index
    %40 = memref.load %arg3[%c3_11] : memref<16xf32, #tpu.memory_space<smem>>
    %c3_12 = arith.constant 3 : index
    %41 = memref.load %arg4[%c3_12] : memref<16xf32, #tpu.memory_space<smem>>
    %42 = vector.broadcast %39 : f32 to vector<2x128xf32>
    %43 = arith.mulf %0, %42 : vector<2x128xf32>
    %44 = vector.broadcast %40 : f32 to vector<2x128xf32>
    %45 = arith.addf %43, %44 : vector<2x128xf32>
    %cst_13 = arith.constant 0.000000e+00 : f32
    %46 = vector.broadcast %cst_13 : f32 to vector<2x128xf32>
    %47 = arith.maximumf %45, %46 : vector<2x128xf32>
    %48 = vector.broadcast %41 : f32 to vector<2x128xf32>
    %49 = arith.mulf %47, %48 : vector<2x128xf32>
    %50 = arith.addf %38, %49 : vector<2x128xf32>
    %c4 = arith.constant 4 : index
    %51 = memref.load %arg2[%c4] : memref<16xf32, #tpu.memory_space<smem>>
    %c4_14 = arith.constant 4 : index
    %52 = memref.load %arg3[%c4_14] : memref<16xf32, #tpu.memory_space<smem>>
    %c4_15 = arith.constant 4 : index
    %53 = memref.load %arg4[%c4_15] : memref<16xf32, #tpu.memory_space<smem>>
    %54 = vector.broadcast %51 : f32 to vector<2x128xf32>
    %55 = arith.mulf %0, %54 : vector<2x128xf32>
    %56 = vector.broadcast %52 : f32 to vector<2x128xf32>
    %57 = arith.addf %55, %56 : vector<2x128xf32>
    %cst_16 = arith.constant 0.000000e+00 : f32
    %58 = vector.broadcast %cst_16 : f32 to vector<2x128xf32>
    %59 = arith.maximumf %57, %58 : vector<2x128xf32>
    %60 = vector.broadcast %53 : f32 to vector<2x128xf32>
    %61 = arith.mulf %59, %60 : vector<2x128xf32>
    %62 = arith.addf %50, %61 : vector<2x128xf32>
    %c5 = arith.constant 5 : index
    %63 = memref.load %arg2[%c5] : memref<16xf32, #tpu.memory_space<smem>>
    %c5_17 = arith.constant 5 : index
    %64 = memref.load %arg3[%c5_17] : memref<16xf32, #tpu.memory_space<smem>>
    %c5_18 = arith.constant 5 : index
    %65 = memref.load %arg4[%c5_18] : memref<16xf32, #tpu.memory_space<smem>>
    %66 = vector.broadcast %63 : f32 to vector<2x128xf32>
    %67 = arith.mulf %0, %66 : vector<2x128xf32>
    %68 = vector.broadcast %64 : f32 to vector<2x128xf32>
    %69 = arith.addf %67, %68 : vector<2x128xf32>
    %cst_19 = arith.constant 0.000000e+00 : f32
    %70 = vector.broadcast %cst_19 : f32 to vector<2x128xf32>
    %71 = arith.maximumf %69, %70 : vector<2x128xf32>
    %72 = vector.broadcast %65 : f32 to vector<2x128xf32>
    %73 = arith.mulf %71, %72 : vector<2x128xf32>
    %74 = arith.addf %62, %73 : vector<2x128xf32>
    %c6 = arith.constant 6 : index
    %75 = memref.load %arg2[%c6] : memref<16xf32, #tpu.memory_space<smem>>
    %c6_20 = arith.constant 6 : index
    %76 = memref.load %arg3[%c6_20] : memref<16xf32, #tpu.memory_space<smem>>
    %c6_21 = arith.constant 6 : index
    %77 = memref.load %arg4[%c6_21] : memref<16xf32, #tpu.memory_space<smem>>
    %78 = vector.broadcast %75 : f32 to vector<2x128xf32>
    %79 = arith.mulf %0, %78 : vector<2x128xf32>
    %80 = vector.broadcast %76 : f32 to vector<2x128xf32>
    %81 = arith.addf %79, %80 : vector<2x128xf32>
    %cst_22 = arith.constant 0.000000e+00 : f32
    %82 = vector.broadcast %cst_22 : f32 to vector<2x128xf32>
    %83 = arith.maximumf %81, %82 : vector<2x128xf32>
    %84 = vector.broadcast %77 : f32 to vector<2x128xf32>
    %85 = arith.mulf %83, %84 : vector<2x128xf32>
    %86 = arith.addf %74, %85 : vector<2x128xf32>
    %c7 = arith.constant 7 : index
    %87 = memref.load %arg2[%c7] : memref<16xf32, #tpu.memory_space<smem>>
    %c7_23 = arith.constant 7 : index
    %88 = memref.load %arg3[%c7_23] : memref<16xf32, #tpu.memory_space<smem>>
    %c7_24 = arith.constant 7 : index
    %89 = memref.load %arg4[%c7_24] : memref<16xf32, #tpu.memory_space<smem>>
    %90 = vector.broadcast %87 : f32 to vector<2x128xf32>
    %91 = arith.mulf %0, %90 : vector<2x128xf32>
    %92 = vector.broadcast %88 : f32 to vector<2x128xf32>
    %93 = arith.addf %91, %92 : vector<2x128xf32>
    %cst_25 = arith.constant 0.000000e+00 : f32
    %94 = vector.broadcast %cst_25 : f32 to vector<2x128xf32>
    %95 = arith.maximumf %93, %94 : vector<2x128xf32>
    %96 = vector.broadcast %89 : f32 to vector<2x128xf32>
    %97 = arith.mulf %95, %96 : vector<2x128xf32>
    %98 = arith.addf %86, %97 : vector<2x128xf32>
    %c8 = arith.constant 8 : index
    %99 = memref.load %arg2[%c8] : memref<16xf32, #tpu.memory_space<smem>>
    %c8_26 = arith.constant 8 : index
    %100 = memref.load %arg3[%c8_26] : memref<16xf32, #tpu.memory_space<smem>>
    %c8_27 = arith.constant 8 : index
    %101 = memref.load %arg4[%c8_27] : memref<16xf32, #tpu.memory_space<smem>>
    %102 = vector.broadcast %99 : f32 to vector<2x128xf32>
    %103 = arith.mulf %0, %102 : vector<2x128xf32>
    %104 = vector.broadcast %100 : f32 to vector<2x128xf32>
    %105 = arith.addf %103, %104 : vector<2x128xf32>
    %cst_28 = arith.constant 0.000000e+00 : f32
    %106 = vector.broadcast %cst_28 : f32 to vector<2x128xf32>
    %107 = arith.maximumf %105, %106 : vector<2x128xf32>
    %108 = vector.broadcast %101 : f32 to vector<2x128xf32>
    %109 = arith.mulf %107, %108 : vector<2x128xf32>
    %110 = arith.addf %98, %109 : vector<2x128xf32>
    %c9 = arith.constant 9 : index
    %111 = memref.load %arg2[%c9] : memref<16xf32, #tpu.memory_space<smem>>
    %c9_29 = arith.constant 9 : index
    %112 = memref.load %arg3[%c9_29] : memref<16xf32, #tpu.memory_space<smem>>
    %c9_30 = arith.constant 9 : index
    %113 = memref.load %arg4[%c9_30] : memref<16xf32, #tpu.memory_space<smem>>
    %114 = vector.broadcast %111 : f32 to vector<2x128xf32>
    %115 = arith.mulf %0, %114 : vector<2x128xf32>
    %116 = vector.broadcast %112 : f32 to vector<2x128xf32>
    %117 = arith.addf %115, %116 : vector<2x128xf32>
    %cst_31 = arith.constant 0.000000e+00 : f32
    %118 = vector.broadcast %cst_31 : f32 to vector<2x128xf32>
    %119 = arith.maximumf %117, %118 : vector<2x128xf32>
    %120 = vector.broadcast %113 : f32 to vector<2x128xf32>
    %121 = arith.mulf %119, %120 : vector<2x128xf32>
    %122 = arith.addf %110, %121 : vector<2x128xf32>
    %c10 = arith.constant 10 : index
    %123 = memref.load %arg2[%c10] : memref<16xf32, #tpu.memory_space<smem>>
    %c10_32 = arith.constant 10 : index
    %124 = memref.load %arg3[%c10_32] : memref<16xf32, #tpu.memory_space<smem>>
    %c10_33 = arith.constant 10 : index
    %125 = memref.load %arg4[%c10_33] : memref<16xf32, #tpu.memory_space<smem>>
    %126 = vector.broadcast %123 : f32 to vector<2x128xf32>
    %127 = arith.mulf %0, %126 : vector<2x128xf32>
    %128 = vector.broadcast %124 : f32 to vector<2x128xf32>
    %129 = arith.addf %127, %128 : vector<2x128xf32>
    %cst_34 = arith.constant 0.000000e+00 : f32
    %130 = vector.broadcast %cst_34 : f32 to vector<2x128xf32>
    %131 = arith.maximumf %129, %130 : vector<2x128xf32>
    %132 = vector.broadcast %125 : f32 to vector<2x128xf32>
    %133 = arith.mulf %131, %132 : vector<2x128xf32>
    %134 = arith.addf %122, %133 : vector<2x128xf32>
    %c11 = arith.constant 11 : index
    %135 = memref.load %arg2[%c11] : memref<16xf32, #tpu.memory_space<smem>>
    %c11_35 = arith.constant 11 : index
    %136 = memref.load %arg3[%c11_35] : memref<16xf32, #tpu.memory_space<smem>>
    %c11_36 = arith.constant 11 : index
    %137 = memref.load %arg4[%c11_36] : memref<16xf32, #tpu.memory_space<smem>>
    %138 = vector.broadcast %135 : f32 to vector<2x128xf32>
    %139 = arith.mulf %0, %138 : vector<2x128xf32>
    %140 = vector.broadcast %136 : f32 to vector<2x128xf32>
    %141 = arith.addf %139, %140 : vector<2x128xf32>
    %cst_37 = arith.constant 0.000000e+00 : f32
    %142 = vector.broadcast %cst_37 : f32 to vector<2x128xf32>
    %143 = arith.maximumf %141, %142 : vector<2x128xf32>
    %144 = vector.broadcast %137 : f32 to vector<2x128xf32>
    %145 = arith.mulf %143, %144 : vector<2x128xf32>
    %146 = arith.addf %134, %145 : vector<2x128xf32>
    %c12 = arith.constant 12 : index
    %147 = memref.load %arg2[%c12] : memref<16xf32, #tpu.memory_space<smem>>
    %c12_38 = arith.constant 12 : index
    %148 = memref.load %arg3[%c12_38] : memref<16xf32, #tpu.memory_space<smem>>
    %c12_39 = arith.constant 12 : index
    %149 = memref.load %arg4[%c12_39] : memref<16xf32, #tpu.memory_space<smem>>
    %150 = vector.broadcast %147 : f32 to vector<2x128xf32>
    %151 = arith.mulf %0, %150 : vector<2x128xf32>
    %152 = vector.broadcast %148 : f32 to vector<2x128xf32>
    %153 = arith.addf %151, %152 : vector<2x128xf32>
    %cst_40 = arith.constant 0.000000e+00 : f32
    %154 = vector.broadcast %cst_40 : f32 to vector<2x128xf32>
    %155 = arith.maximumf %153, %154 : vector<2x128xf32>
    %156 = vector.broadcast %149 : f32 to vector<2x128xf32>
    %157 = arith.mulf %155, %156 : vector<2x128xf32>
    %158 = arith.addf %146, %157 : vector<2x128xf32>
    %c13 = arith.constant 13 : index
    %159 = memref.load %arg2[%c13] : memref<16xf32, #tpu.memory_space<smem>>
    %c13_41 = arith.constant 13 : index
    %160 = memref.load %arg3[%c13_41] : memref<16xf32, #tpu.memory_space<smem>>
    %c13_42 = arith.constant 13 : index
    %161 = memref.load %arg4[%c13_42] : memref<16xf32, #tpu.memory_space<smem>>
    %162 = vector.broadcast %159 : f32 to vector<2x128xf32>
    %163 = arith.mulf %0, %162 : vector<2x128xf32>
    %164 = vector.broadcast %160 : f32 to vector<2x128xf32>
    %165 = arith.addf %163, %164 : vector<2x128xf32>
    %cst_43 = arith.constant 0.000000e+00 : f32
    %166 = vector.broadcast %cst_43 : f32 to vector<2x128xf32>
    %167 = arith.maximumf %165, %166 : vector<2x128xf32>
    %168 = vector.broadcast %161 : f32 to vector<2x128xf32>
    %169 = arith.mulf %167, %168 : vector<2x128xf32>
    %170 = arith.addf %158, %169 : vector<2x128xf32>
    %c14 = arith.constant 14 : index
    %171 = memref.load %arg2[%c14] : memref<16xf32, #tpu.memory_space<smem>>
    %c14_44 = arith.constant 14 : index
    %172 = memref.load %arg3[%c14_44] : memref<16xf32, #tpu.memory_space<smem>>
    %c14_45 = arith.constant 14 : index
    %173 = memref.load %arg4[%c14_45] : memref<16xf32, #tpu.memory_space<smem>>
    %174 = vector.broadcast %171 : f32 to vector<2x128xf32>
    %175 = arith.mulf %0, %174 : vector<2x128xf32>
    %176 = vector.broadcast %172 : f32 to vector<2x128xf32>
    %177 = arith.addf %175, %176 : vector<2x128xf32>
    %cst_46 = arith.constant 0.000000e+00 : f32
    %178 = vector.broadcast %cst_46 : f32 to vector<2x128xf32>
    %179 = arith.maximumf %177, %178 : vector<2x128xf32>
    %180 = vector.broadcast %173 : f32 to vector<2x128xf32>
    %181 = arith.mulf %179, %180 : vector<2x128xf32>
    %182 = arith.addf %170, %181 : vector<2x128xf32>
    %c15 = arith.constant 15 : index
    %183 = memref.load %arg2[%c15] : memref<16xf32, #tpu.memory_space<smem>>
    %c15_47 = arith.constant 15 : index
    %184 = memref.load %arg3[%c15_47] : memref<16xf32, #tpu.memory_space<smem>>
    %c15_48 = arith.constant 15 : index
    %185 = memref.load %arg4[%c15_48] : memref<16xf32, #tpu.memory_space<smem>>
    %186 = vector.broadcast %183 : f32 to vector<2x128xf32>
    %187 = arith.mulf %0, %186 : vector<2x128xf32>
    %188 = vector.broadcast %184 : f32 to vector<2x128xf32>
    %189 = arith.addf %187, %188 : vector<2x128xf32>
    %cst_49 = arith.constant 0.000000e+00 : f32
    %190 = vector.broadcast %cst_49 : f32 to vector<2x128xf32>
    %191 = arith.maximumf %189, %190 : vector<2x128xf32>
    %192 = vector.broadcast %185 : f32 to vector<2x128xf32>
    %193 = arith.mulf %191, %192 : vector<2x128xf32>
    %194 = arith.addf %182, %193 : vector<2x128xf32>
    %c0_50 = arith.constant 0 : index
    %c0_51 = arith.constant 0 : index
    %195 = vector.load %arg6[%c0_50, %c0_51] : memref<2x128xf32, #tpu.memory_space<vmem>>, vector<2x128xf32>
    tpu.vector_store %arg6[%c0_50, %c0_51], %194 {strides = array<i32>} : memref<2x128xf32, #tpu.memory_space<vmem>>, vector<2x128xf32>,
    return
  }
  func.func @transform_0(%arg0: i32) -> (i32, i32) {
    %c0_i32 = arith.constant 0 : i32
    %c0_i32_0 = arith.constant 0 : i32
    return %arg0, %c0_i32 : i32, i32
  }
  func.func @transform_1(%arg0: i32) -> i32 {
    %c0_i32 = arith.constant 0 : i32
    %c0_i32_0 = arith.constant 0 : i32
    return %c0_i32 : i32
  }
  func.func @transform_2(%arg0: i32) -> i32 {
    %c0_i32 = arith.constant 0 : i32
    %c0_i32_0 = arith.constant 0 : i32
    return %c0_i32 : i32
  }
  func.func @transform_3(%arg0: i32) -> i32 {
    %c0_i32 = arith.constant 0 : i32
    %c0_i32_0 = arith.constant 0 : i32
    return %c0_i32 : i32
  }
  func.func @transform_4(%arg0: i32) -> i32 {
    %c0_i32 = arith.constant 0 : i32
    %c0_i32_0 = arith.constant 0 : i32
    return %c0_i32 : i32
  }
  func.func @transform_5(%arg0: i32) -> (i32, i32) {
    %c0_i32 = arith.constant 0 : i32
    %c0_i32_0 = arith.constant 0 : i32
    return %arg0, %c0_i32 : i32, i32
  }
}

</mosaic_0001>

<llo_original>
// kernel: tpu_custom_call.1
$region0: #{tpu_custom_call.1}
  #allocation0 [shape = 'u32[]', space=smem, size = 0x4, offset = 0x4, fixed_abs, tag = 'smem constant byte address 0x4 - core index']
  #allocation1 [shape = 'u32[144,128]{1,0:T(1,128)}', space=vmem, size = 0x12000, scoped, tag = 'internal scratch']
  #allocation2 [shape = 'f32[1]{0:T(128)S(6)}', space=smem, size = 0x200, scoped, tag = 'scoped memory for tpu_custom_call.1']
  %s0 = inlined_call_operand.vmem [shape: f32[2,128], index: 0, kind: input, shape index: {}]
  %s1 = inlined_call_operand.vmem [shape: f32[16], index: 1, kind: input, shape index: {}]
  %s2 = inlined_call_operand.vmem [shape: f32[16], index: 2, kind: input, shape index: {}]
  %s3 = inlined_call_operand.vmem [shape: f32[16], index: 3, kind: input, shape index: {}]
  %s4 = inlined_call_operand.<no memory space> [shape: f32[1], index: 4, kind: input, shape index: {}]
  %s5 = inlined_call_operand.hbm [shape: f32[2,128], index: 5, kind: output, shape index: {}]
  %s6 = sld [smem:[#allocation0]]
  $region42: #{tpu_custom_call.1} parent=0
    _
  %s8 = ssub.s32 1, %s6
  %s9 = scalar_select 0, %s8, %s6
  %10 = sst [smem:[#allocation2]] %s4
  $region1: #{tpu_custom_call.1} parent=0
    #allocation3 [shape = 'u8[512]{0}', space=smem, size = 0x200, scoped, tag = 'input window, operand 1, single buffered']
    #allocation4 [shape = 's32[1]{0}', space=sflag, size = 0x4, scoped, tag = 'scoped memory for tpu_custom_call.1']
    #allocation5 [shape = 's32[1]{0}', space=sflag, size = 0x4, scoped, tag = 'scoped memory for tpu_custom_call.1']
    #allocation6 [shape = 'u8[512]{0}', space=smem, size = 0x200, scoped, tag = 'input window, operand 2, single buffered']
    #allocation7 [shape = 's32[1]{0}', space=sflag, size = 0x4, scoped, tag = 'scoped memory for tpu_custom_call.1']
    #allocation8 [shape = 'u8[512]{0}', space=smem, size = 0x200, scoped, tag = 'input window, operand 3, single buffered']
    #allocation9 [shape = 'u8[1024]{0}', space=vmem, size = 0x400, scoped, tag = 'output window, operand 0, single buffered']
    %11 = vsyncpa [#allocation5], 0
    %12 = vsyncpa [#allocation7], 0
    %13 = vsyncpa [#allocation4], 0
    // Predicated region
    $region2: #{tpu_custom_call.1} parent=1 // pred_check
      _
    $region3: #{tpu_custom_call.1} parent=1 // pred_check_branch
      %15 = sbr.rel (0) target = $region5
    $region4: #{tpu_custom_call.1} parent=1 // pred_region
      _
    $region5: #{tpu_custom_call.1} parent=1 // pred_fallthru
      _
    // Predicated region
    $region6: #{tpu_custom_call.1} parent=1 // pred_check
      _
    $region7: #{tpu_custom_call.1} parent=1 // pred_check_branch
      %17 = sbr.rel (0) target = $region9
    $region8: #{tpu_custom_call.1} parent=1 // pred_region
      %s19 = ssub.s32 16, 16
      %20 = vsyncadd [#allocation5], %s19
      %s22 = sshll.u32 %s1, 4
      %s23 = int_to_ptr.vmem [resolvable:$true] %s22
      %25 = dma.vmem_to_smem %s23, 16, [#allocation3], [#allocation5]
    $region9: #{tpu_custom_call.1} parent=1 // pred_fallthru
      _
    // Predicated region
    $region10: #{tpu_custom_call.1} parent=1 // pred_check
      _
    $region11: #{tpu_custom_call.1} parent=1 // pred_check_branch
      %27 = sbr.rel (0) target = $region13
    $region12: #{tpu_custom_call.1} parent=1 // pred_region
      %s29 = ssub.s32 16, 16
      %30 = vsyncadd [#allocation7], %s29
      %s32 = sshll.u32 %s2, 4
      %s33 = int_to_ptr.vmem [resolvable:$true] %s32
      %35 = dma.vmem_to_smem %s33, 16, [#allocation6], [#allocation7]
    $region13: #{tpu_custom_call.1} parent=1 // pred_fallthru
      _
    // Predicated region
    $region14: #{tpu_custom_call.1} parent=1 // pred_check
      _
    $region15: #{tpu_custom_call.1} parent=1 // pred_check_branch
      %37 = sbr.rel (0) target = $region17
    $region16: #{tpu_custom_call.1} parent=1 // pred_region
      %s39 = ssub.s32 16, 16
      %40 = vsyncadd [#allocation7], %s39
      %s42 = sshll.u32 %s3, 4
      %s43 = int_to_ptr.vmem [resolvable:$true] %s42
      %45 = dma.vmem_to_smem %s43, 16, [#allocation8], [#allocation7]
    $region17: #{tpu_custom_call.1} parent=1 // pred_fallthru
      _
    // Predicated region
    $region18: #{tpu_custom_call.1} parent=1 // pred_check
      _
    $region19: #{tpu_custom_call.1} parent=1 // pred_check_branch
      %47 = sbr.rel (0) target = $region21
    $region20: #{tpu_custom_call.1} parent=1 // pred_region
      _
    $region21: #{tpu_custom_call.1} parent=1 // pred_fallthru
      _
    // Predicated region
    $region22: #{tpu_custom_call.1} parent=1 // pred_check
      _
    $region23: #{tpu_custom_call.1} parent=1 // pred_check_branch
      %49 = sbr.rel (0) target = $region25
    $region24: #{tpu_custom_call.1} parent=1 // pred_region
      %50 = dma.done [#allocation5], 16
    $region25: #{tpu_custom_call.1} parent=1 // pred_fallthru
      _
    // Predicated region
    $region26: #{tpu_custom_call.1} parent=1 // pred_check
      _
    $region27: #{tpu_custom_call.1} parent=1 // pred_check_branch
      %52 = sbr.rel (0) target = $region29
    $region28: #{tpu_custom_call.1} parent=1 // pred_region
      %53 = dma.done [#allocation7], 16
    $region29: #{tpu_custom_call.1} parent=1 // pred_fallthru
      _
    // Predicated region
    $region30: #{tpu_custom_call.1} parent=1 // pred_check
      _
    $region31: #{tpu_custom_call.1} parent=1 // pred_check_branch
      %55 = sbr.rel (0) target = $region33
    $region32: #{tpu_custom_call.1} parent=1 // pred_region
      %56 = dma.done [#allocation7], 16
    $region33: #{tpu_custom_call.1} parent=1 // pred_fallthru
      _
    %57 = sfence
    %v58 = vld [vmem:[%s0] sm:$0x3]
    %s59 = sld [smem:[#allocation2]]
    %v60 = vstv %s59
    %s61 = sld [smem:[#allocation3]]
    %s62 = sld [smem:[#allocation6]]
    %s63 = sld [smem:[#allocation8]]
    %v64 = vstv %s61
    %v65 = vmul.f32 %v58, %v64
    %v66 = vstv %s62
    %v67 = vadd.f32 %v65, %v66
    %v68 = vmax.f32 %v67, 0.0
    %v69 = vstv %s63
    %v70 = vmul.f32 %v68, %v69
    %v71 = vadd.f32 %v60, %v70
    %s72 = sld [smem:[#allocation3 + $0x1]]
    %s73 = sld [smem:[#allocation6 + $0x1]]
    %s74 = sld [smem:[#allocation8 + $0x1]]
    %v75 = vstv %s72
    %v76 = vmul.f32 %v58, %v75
    %v77 = vstv %s73
    %v78 = vadd.f32 %v76, %v77
    %v79 = vmax.f32 %v78, 0.0
    %v80 = vstv %s74
    %v81 = vmul.f32 %v79, %v80
    %v82 = vadd.f32 %v71, %v81
    %s83 = sld [smem:[#allocation3 + $0x2]]
    %s84 = sld [smem:[#allocation6 + $0x2]]
    %s85 = sld [smem:[#allocation8 + $0x2]]
    %v86 = vstv %s83
    %v87 = vmul.f32 %v58, %v86
    %v88 = vstv %s84
    %v89 = vadd.f32 %v87, %v88
    %v90 = vmax.f32 %v89, 0.0
    %v91 = vstv %s85
    %v92 = vmul.f32 %v90, %v91
    %v93 = vadd.f32 %v82, %v92
    %s94 = sld [smem:[#allocation3 + $0x3]]
    %s95 = sld [smem:[#allocation6 + $0x3]]
    %s96 = sld [smem:[#allocation8 + $0x3]]
    %v97 = vstv %s94
    %v98 = vmul.f32 %v58, %v97
    %v99 = vstv %s95
    %v100 = vadd.f32 %v98, %v99
    %v101 = vmax.f32 %v100, 0.0
    %v102 = vstv %s96
    %v103 = vmul.f32 %v101, %v102
    %v104 = vadd.f32 %v93, %v103
    %s105 = sld [smem:[#allocation3 + $0x4]]
    %s106 = sld [smem:[#allocation6 + $0x4]]
    %s107 = sld [smem:[#allocation8 + $0x4]]
    %v108 = vstv %s105
    %v109 = vmul.f32 %v58, %v108
    %v110 = vstv %s106
    %v111 = vadd.f32 %v109, %v110
    %v112 = vmax.f32 %v111, 0.0
    %v113 = vstv %s107
    %v114 = vmul.f32 %v112, %v113
    %v115 = vadd.f32 %v104, %v114
    %s116 = sld [smem:[#allocation3 + $0x5]]
    %s117 = sld [smem:[#allocation6 + $0x5]]
    %s118 = sld [smem:[#allocation8 + $0x5]]
    %v119 = vstv %s116
    %v120 = vmul.f32 %v58, %v119
    %v121 = vstv %s117
    %v122 = vadd.f32 %v120, %v121
    %v123 = vmax.f32 %v122, 0.0
    %v124 = vstv %s118
    %v125 = vmul.f32 %v123, %v124
    %v126 = vadd.f32 %v115, %v125
    %s127 = sld [smem:[#allocation3 + $0x6]]
    %s128 = sld [smem:[#allocation6 + $0x6]]
    %s129 = sld [smem:[#allocation8 + $0x6]]
    %v130 = vstv %s127
    %v131 = vmul.f32 %v58, %v130
    %v132 = vstv %s128
    %v133 = vadd.f32 %v131, %v132
    %v134 = vmax.f32 %v133, 0.0
    %v135 = vstv %s129
    %v136 = vmul.f32 %v134, %v135
    %v137 = vadd.f32 %v126, %v136
    %s138 = sld [smem:[#allocation3 + $0x7]]
    %s139 = sld [smem:[#allocation6 + $0x7]]
    %s140 = sld [smem:[#allocation8 + $0x7]]
    %v141 = vstv %s138
    %v142 = vmul.f32 %v58, %v141
    %v143 = vstv %s139
    %v144 = vadd.f32 %v142, %v143
    %v145 = vmax.f32 %v144, 0.0
    %v146 = vstv %s140
    %v147 = vmul.f32 %v145, %v146
    %v148 = vadd.f32 %v137, %v147
    %s149 = sld [smem:[#allocation3 + $0x8]]
    %s150 = sld [smem:[#allocation6 + $0x8]]
    %s151 = sld [smem:[#allocation8 + $0x8]]
    %v152 = vstv %s149
    %v153 = vmul.f32 %v58, %v152
    %v154 = vstv %s150
    %v155 = vadd.f32 %v153, %v154
    %v156 = vmax.f32 %v155, 0.0
    %v157 = vstv %s151
    %v158 = vmul.f32 %v156, %v157
    %v159 = vadd.f32 %v148, %v158
    %s160 = sld [smem:[#allocation3 + $0x9]]
    %s161 = sld [smem:[#allocation6 + $0x9]]
    %s162 = sld [smem:[#allocation8 + $0x9]]
    %v163 = vstv %s160
    %v164 = vmul.f32 %v58, %v163
    %v165 = vstv %s161
    %v166 = vadd.f32 %v164, %v165
    %v167 = vmax.f32 %v166, 0.0
    %v168 = vstv %s162
    %v169 = vmul.f32 %v167, %v168
    %v170 = vadd.f32 %v159, %v169
    %s171 = sld [smem:[#allocation3 + $0xa]]
    %s172 = sld [smem:[#allocation6 + $0xa]]
    %s173 = sld [smem:[#allocation8 + $0xa]]
    %v174 = vstv %s171
    %v175 = vmul.f32 %v58, %v174
    %v176 = vstv %s172
    %v177 = vadd.f32 %v175, %v176
    %v178 = vmax.f32 %v177, 0.0
    %v179 = vstv %s173
    %v180 = vmul.f32 %v178, %v179
    %v181 = vadd.f32 %v170, %v180
    %s182 = sld [smem:[#allocation3 + $0xb]]
    %s183 = sld [smem:[#allocation6 + $0xb]]
    %s184 = sld [smem:[#allocation8 + $0xb]]
    %v185 = vstv %s182
    %v186 = vmul.f32 %v58, %v185
    %v187 = vstv %s183
    %v188 = vadd.f32 %v186, %v187
    %v189 = vmax.f32 %v188, 0.0
    %v190 = vstv %s184
    %v191 = vmul.f32 %v189, %v190
    %v192 = vadd.f32 %v181, %v191
    %s193 = sld [smem:[#allocation3 + $0xc]]
    %s194 = sld [smem:[#allocation6 + $0xc]]
    %s195 = sld [smem:[#allocation8 + $0xc]]
    %v196 = vstv %s193
    %v197 = vmul.f32 %v58, %v196
    %v198 = vstv %s194
    %v199 = vadd.f32 %v197, %v198
    %v200 = vmax.f32 %v199, 0.0
    %v201 = vstv %s195
    %v202 = vmul.f32 %v200, %v201
    %v203 = vadd.f32 %v192, %v202
    %s204 = sld [smem:[#allocation3 + $0xd]]
    %s205 = sld [smem:[#allocation6 + $0xd]]
    %s206 = sld [smem:[#allocation8 + $0xd]]
    %v207 = vstv %s204
    %v208 = vmul.f32 %v58, %v207
    %v209 = vstv %s205
    %v210 = vadd.f32 %v208, %v209
    %v211 = vmax.f32 %v210, 0.0
    %v212 = vstv %s206
    %v213 = vmul.f32 %v211, %v212
    %v214 = vadd.f32 %v203, %v213
    %s215 = sld [smem:[#allocation3 + $0xe]]
    %s216 = sld [smem:[#allocation6 + $0xe]]
    %s217 = sld [smem:[#allocation8 + $0xe]]
    %v218 = vstv %s215
    %v219 = vmul.f32 %v58, %v218
    %v220 = vstv %s216
    %v221 = vadd.f32 %v219, %v220
    %v222 = vmax.f32 %v221, 0.0
    %v223 = vstv %s217
    %v224 = vmul.f32 %v222, %v223
    %v225 = vadd.f32 %v214, %v224
    %s226 = sld [smem:[#allocation3 + $0xf]]
    %s227 = sld [smem:[#allocation6 + $0xf]]
    %s228 = sld [smem:[#allocation8 + $0xf]]
    %v229 = vstv %s226
    %v230 = vmul.f32 %v58, %v229
    %v231 = vstv %s227
    %v232 = vadd.f32 %v230, %v231
    %v233 = vmax.f32 %v232, 0.0
    %v234 = vstv %s228
    %v235 = vmul.f32 %v233, %v234
    %v236 = vadd.f32 %v225, %v235
    %237 = vst [vmem:[#allocation9] sm:$0x3] %v236
    // Predicated region
    $region34: #{tpu_custom_call.1} parent=1 // pred_check
      _
    $region35: #{tpu_custom_call.1} parent=1 // pred_check_branch
      %239 = sbr.rel (0) target = $region37
    $region36: #{tpu_custom_call.1} parent=1 // pred_region
      %s241 = ssub.s32 32, 32
      %242 = vsyncadd [#allocation4], %s241
      %s244 = sshll.u32 [#allocation9], 4
      %s245 = int_to_ptr.vmem [resolvable:$true] %s244
      %247 = dma.vmem_to_hbm [thread:$0]  %s245, 32, %s5, [#allocation4]
    $region37: #{tpu_custom_call.1} parent=1 // pred_fallthru
      _
    // Predicated region
    $region38: #{tpu_custom_call.1} parent=1 // pred_check
      _
    $region39: #{tpu_custom_call.1} parent=1 // pred_check_branch
      %249 = sbr.rel (0) target = $region41
    $region40: #{tpu_custom_call.1} parent=1 // pred_region
      %250 = dma.done [#allocation4], 32
    $region41: #{tpu_custom_call.1} parent=1 // pred_fallthru
      _
    %251 = vsyncpa [#allocation4], 1
    %252 = vsyncpa [#allocation5], 1
    %253 = vsyncpa [#allocation7], 1

</llo_original>
